<compile_context>
chip_gen: v6e
topology: v6e:2x2x1
jax: 0.10.0
libtpu: 0.0.40
codegen_flags: <defaults>
</compile_context>

<pallas_src>
import functools
import math

import jax
import jax.numpy as jnp
from jax import lax
from jax.experimental import pallas as pl
from jax.experimental.pallas import tpu as pltpu


def _attn_kernel(x_ref, k_ref, v_ref, wq_ref, wp_ref, bq_ref, bp_ref, o_ref,
                 q_sc, m_sc, l_sc, acc_sc, *, tk, s_valid, masked):
    ki = pl.program_id(2)
    nk = pl.num_programs(2)

    # First kv step for this query tile: project Q once, init running stats.
    @pl.when(ki == 0)
    def _():
        xq_b = x_ref[0].astype(jnp.bfloat16)                        # (tq, C)
        q = jnp.dot(xq_b, wq_ref[...],
                    preferred_element_type=jnp.float32) + bq_ref[...]
        q_sc[...] = q.astype(jnp.bfloat16)
        m_sc[...] = jnp.full_like(m_sc, -jnp.inf)
        l_sc[...] = jnp.zeros_like(l_sc)
        acc_sc[...] = jnp.zeros_like(acc_sc)

    k = k_ref[0]                                                    # (tk, C) bf16
    v = v_ref[0]                                                    # (tk, C) bf16

    # Attention logits: contract over channels (no explicit k transpose).
    s = lax.dot_general(q_sc[...], k,
                        dimension_numbers=(((1,), (1,)), ((), ())),
                        preferred_element_type=jnp.float32)          # (tq, tk)
    if masked:
        kpos = ki * tk + lax.broadcasted_iota(jnp.int32, s.shape, 1)
        s = jnp.where(kpos < s_valid, s, -jnp.inf)

    # Online softmax: f32 statistics, bf16 probabilities.
    m_prev = m_sc[...]
    m_new = jnp.maximum(m_prev, jnp.max(s, axis=-1, keepdims=True))
    alpha = jnp.exp(m_prev - m_new)
    p = jnp.exp((s - m_new).astype(jnp.bfloat16))                    # (tq, tk)
    l_new = alpha * l_sc[...] + jnp.sum(p, axis=-1, keepdims=True,
                                        dtype=jnp.float32)
    acc_new = alpha * acc_sc[...] + jnp.dot(p, v,
                                            preferred_element_type=jnp.float32)

    # Steady state: write back running stats (skipped on the final kv step).
    @pl.when(ki < nk - 1)
    def _():
        m_sc[...] = m_new
        l_sc[...] = l_new
        acc_sc[...] = acc_new

    # Finalize: normalize, output projection, residual add.
    @pl.when(ki == nk - 1)
    def _():
        inv_l = pl.reciprocal(l_new, approx=True)                    # (tq, 1)
        h = acc_new * inv_l                                          # (tq, C)
        h = jnp.dot(h.astype(jnp.bfloat16), wp_ref[...],
                    preferred_element_type=jnp.float32) + bp_ref[...]
        o_ref[0] = (x_ref[0] + h).astype(o_ref.dtype)


def _choose_tiles(s, cap):
    """Return (tile, s_pad), tile | s_pad.

    Tiles are multiples of 128 when s >= 128 (MXU N-dim / lane alignment) and
    multiples of 16 otherwise. Awkward lengths are padded (masked in-kernel)
    rather than materializing a full (S, S) logits tile.
    """
    if s < 128:
        s_pad = -(-s // 16) * 16
        return s_pad, s_pad
    cap = max(128, (cap // 128) * 128)
    if s % 128 == 0:
        best = 128
        t = 256
        while t <= cap:
            if s % t == 0:
                best = t
            t += 128
        return best, s
    best_t, best_pad = 128, -(-s // 128) * 128
    t = 256
    while t <= cap:
        s_pad = -(-s // t) * t
        if s_pad <= best_pad:
            best_t, best_pad = t, s_pad
        t += 128
    return best_t, best_pad


def _vmem_capacity_bytes():
    try:
        return int(pltpu.get_tpu_info().vmem_capacity_bytes)
    except Exception:
        return 64 << 20   # conservative: v7x per-TensorCore VMEM


def attn_block_pallas(x_nchw, params, *, tile_cap=None):
    """x_nchw: (B, C, H, W) float32. params: dict of (C,C) weights, (1,C) biases."""
    B, C, H, W = x_nchw.shape
    S = H * W
    vmem_cap = _vmem_capacity_bytes()

    if tile_cap is None:
        # Bigger tiles on 128 MiB parts (v5e/v6e) for large feature maps.
        tile_cap = 512 if (vmem_cap >= (100 << 20) and S >= 1024) else 256

    tk, S_pad = _choose_tiles(S, tile_cap)
    tq = tk
    # Keep >= 2 (batch x query-tile) parallel blocks so both v7x TensorCores
    # get work; costs at most one extra cheap grid step on single-TC parts.
    while B * (S_pad // tq) < 2 and tq >= 32 and S_pad % (tq // 2) == 0:
        tq //= 2
    masked = S_pad != S

    # NCHW -> (B, S, C); pad the sequence axis if needed (masked in-kernel).
    x_flat = jnp.transpose(x_nchw, (0, 2, 3, 1)).reshape(B, S, C).astype(jnp.float32)
    if masked:
        x_flat = jnp.pad(x_flat, ((0, 0), (0, S_pad - S), (0, 0)))

    # Fold the C^-1/2 scale into the q projection; bf16 weights for the MXU.
    scale = float(C) ** -0.5
    wq = (params["wq"] * scale).astype(jnp.bfloat16)
    bq = (params["bq"] * scale).astype(jnp.float32)
    wp = params["wp"].astype(jnp.bfloat16)
    bp = params["bp"].astype(jnp.float32)

    # Hoist the fused K/V projection out of the kernel: one XLA GEMM per call,
    # stored bf16 so the kv stream (re-read along the ki axis) is half the bytes.
    x_bf = x_flat.astype(jnp.bfloat16)
    wkv = jnp.concatenate([params["wk"], params["wv"]], axis=1).astype(jnp.bfloat16)
    bkv = jnp.concatenate([params["bk"], params["bv"]], axis=1).astype(jnp.float32)
    kv = jnp.dot(x_bf.reshape(B * S_pad, C), wkv,
                 preferred_element_type=jnp.float32).reshape(B, S_pad, 2 * C) + bkv
    k_bf = kv[..., :C].astype(jnp.bfloat16)
    v_bf = kv[..., C:].astype(jnp.bfloat16)

    nq = S_pad // tq
    nk = S_pad // tk

    kernel = functools.partial(_attn_kernel, tk=tk, s_valid=S, masked=masked)
    const_spec = lambda shp: pl.BlockSpec(shp, lambda b, qi, ki: (0, 0))

    # VMEM budget: double-buffered I/O + weights + scratch + (tq, tk)
    # intermediates, x2 headroom, clamped to ~80% of the physical capacity.
    io_bytes = 2 * (tq * C * 4 + 2 * tk * C * 2 + tq * C * 4)
    w_bytes = 2 * (2 * C * C * 2 + 2 * C * 4)
    scratch_bytes = tq * C * 2 + tq * C * 4 + 2 * tq * 4
    inter_bytes = tq * tk * 6 + 4 * tq * C * 4
    vmem_limit = int(min(max(2 * (io_bytes + w_bytes + scratch_bytes + inter_bytes),
                             8 << 20),
                         int(vmem_cap * 0.8)))

    out_flat = pl.pallas_call(
        kernel,
        out_shape=jax.ShapeDtypeStruct((B, S_pad, C), jnp.float32),
        grid_spec=pltpu.PrefetchScalarGridSpec(
            num_scalar_prefetch=0,
            grid=(B, nq, nk),
            in_specs=[
                pl.BlockSpec((1, tq, C), lambda b, qi, ki: (b, qi, 0)),   # x (q / residual)
                pl.BlockSpec((1, tk, C), lambda b, qi, ki: (b, ki, 0)),   # K (bf16)
                pl.BlockSpec((1, tk, C), lambda b, qi, ki: (b, ki, 0)),   # V (bf16)
                const_spec((C, C)),      # wq (scaled)
                const_spec((C, C)),      # wp
                const_spec((1, C)),      # bq (scaled)
                const_spec((1, C)),      # bp
            ],
            out_specs=pl.BlockSpec((1, tq, C), lambda b, qi, ki: (b, qi, 0)),
            scratch_shapes=[
                pltpu.VMEM((tq, C), jnp.bfloat16),   # cached Q tile
                pltpu.VMEM((tq, 1), jnp.float32),    # running max m
                pltpu.VMEM((tq, 1), jnp.float32),    # running denom l
                pltpu.VMEM((tq, C), jnp.float32),    # unnormalized accumulator
            ],
        ),
        compiler_params=pltpu.CompilerParams(
            dimension_semantics=("parallel", "parallel", "arbitrary"),
            vmem_limit_bytes=vmem_limit),
    )(x_flat, k_bf, v_bf, wq, wp, bq, bp)

    if masked:
        out_flat = out_flat[:, :S, :]
    return jnp.transpose(out_flat.reshape(B, H, W, C), (0, 3, 1, 2))


def _xavier_uniform(key, c_in, c_out, gain=1.0):
    # 1x1 conv: fan_in = c_in, fan_out = c_out. Stored as (C_in, C_out).
    bound = gain * math.sqrt(6.0 / (c_in + c_out))
    return jax.random.uniform(key, (c_in, c_out), jnp.float32, -bound, bound)


def make_params(key, channel, proj_gain=1e-5):
    kq, kk, kv, kp = jax.random.split(key, 4)
    return {
        # proj_q / proj_k / proj_v: xavier_uniform (gain=1), zero bias
        "wq": _xavier_uniform(kq, channel, channel, 1.0),
        "wk": _xavier_uniform(kk, channel, channel, 1.0),
        "wv": _xavier_uniform(kv, channel, channel, 1.0),
        # proj: xavier_uniform with gain=1e-5 (as in AttnBlock.initialize)
        "wp": _xavier_uniform(kp, channel, channel, proj_gain),
        "bq": jnp.zeros((1, channel), jnp.float32),
        "bk": jnp.zeros((1, channel), jnp.float32),
        "bv": jnp.zeros((1, channel), jnp.float32),
        "bp": jnp.zeros((1, channel), jnp.float32),
    }


def _reference_jax(x_nchw, params):
    # Pure-JAX f32 reference mirroring the PyTorch forward.
    B, C, H, W = x_nchw.shape
    S = H * W
    x = jnp.transpose(x_nchw, (0, 2, 3, 1)).reshape(B, S, C)
    q = x @ params["wq"] + params["bq"]
    k = x @ params["wk"] + params["bk"]
    v = x @ params["wv"] + params["bv"]
    w = jnp.einsum("bsc,btc->bst", q, k) * (C ** -0.5)
    w = jax.nn.softmax(w, axis=-1)
    h = jnp.einsum("bst,btc->bsc", w, v)
    h = h @ params["wp"] + params["bp"]
    out = x + h
    return jnp.transpose(out.reshape(B, H, W, C), (0, 3, 1, 2))


if __name__ == "__main__":
    key = jax.random.PRNGKey(0)
    k_x, k_p, k_x2, k_x3, k_p2 = jax.random.split(key, 5)

    C = 64  # GroupNorm(32, C) in the module requires C % 32 == 0.

    # --- Test A: module-faithful init (proj gain 1e-5), single kv tile, and
    #     the small-batch query split (B * nq == 1 -> tq halved). ---
    B, H, W = 1, 8, 8
    params = make_params(k_p, C)
    x = jax.random.normal(k_x, (B, C, H, W), jnp.float32)
    out = jax.block_until_ready(attn_block_pallas(x, params))
    ref = _reference_jax(x, params)
    assert out.shape == (B, C, H, W)
    assert jnp.allclose(out, ref, atol=2e-2, rtol=2e-2), "mismatch vs reference (8x8)"

    # --- Test B: multi-tile online softmax (grid (2,2,2)); stress params with
    #     proj gain 1.0 so the attention output actually matters numerically. ---
    params_s = make_params(k_p2, C, proj_gain=1.0)
    B2, H2, W2 = 2, 16, 16
    x2 = jax.random.normal(k_x2, (B2, C, H2, W2), jnp.float32)
    out2 = jax.block_until_ready(attn_block_pallas(x2, params_s, tile_cap=128))
    ref2 = _reference_jax(x2, params_s)
    assert out2.shape == (B2, C, H2, W2)
    assert jnp.allclose(out2, ref2, atol=5e-2, rtol=5e-2), "mismatch vs reference (16x16)"

    # --- Test C: awkward spatial size (12x12 -> S=144, padded + masked). ---
    B3, H3, W3 = 1, 12, 12
    x3 = jax.random.normal(k_x3, (B3, C, H3, W3), jnp.float32)
    out3 = jax.block_until_ready(attn_block_pallas(x3, params_s))
    ref3 = _reference_jax(x3, params_s)
    assert out3.shape == (B3, C, H3, W3)
    assert jnp.allclose(out3, ref3, atol=5e-2, rtol=5e-2), "mismatch vs reference (12x12 masked)"

    print("KERNEL_OK")
</pallas_src>

<mosaic_0001>
module attributes {stable_mosaic.version = 11 : i64} {
  func.func @_attn_kernel(%arg0: i32, %arg1: i32, %arg2: i32, %arg3: memref<1x32x64xf32, #tpu.memory_space<vmem>>, %arg4: memref<1x64x64xbf16, #tpu.memory_space<vmem>>, %arg5: memref<1x64x64xbf16, #tpu.memory_space<vmem>>, %arg6: memref<64x64xbf16, #tpu.memory_space<vmem>>, %arg7: memref<64x64xbf16, #tpu.memory_space<vmem>>, %arg8: memref<1x64xf32, #tpu.memory_space<vmem>>, %arg9: memref<1x64xf32, #tpu.memory_space<vmem>>, %arg10: memref<1x32x64xf32, #tpu.memory_space<vmem>>, %arg11: memref<32x64xbf16, #tpu.memory_space<vmem>>, %arg12: memref<32x1xf32, #tpu.memory_space<vmem>>, %arg13: memref<32x1xf32, #tpu.memory_space<vmem>>, %arg14: memref<32x64xf32, #tpu.memory_space<vmem>>) attributes {dimension_semantics = [#tpu.dimension_semantics<parallel>, #tpu.dimension_semantics<parallel>, #tpu.dimension_semantics<arbitrary>], iteration_bounds = array<i64: 1, 2, 1>, scalar_prefetch = 0 : i64, scratch_operands = 4 : i64, tpu.core_type = #tpu.core_type<tc>, window_params = [{transform_indices = @transform_0, window_bounds = array<i64: 1, 32, 64>}, {transform_indices = @transform_1, window_bounds = array<i64: 1, 64, 64>}, {transform_indices = @transform_2, window_bounds = array<i64: 1, 64, 64>}, {pipeline_mode = #tpu.pipeline_mode<synchronous>, transform_indices = @transform_3, window_bounds = array<i64: 64, 64>}, {pipeline_mode = #tpu.pipeline_mode<synchronous>, transform_indices = @transform_4, window_bounds = array<i64: 64, 64>}, {pipeline_mode = #tpu.pipeline_mode<synchronous>, transform_indices = @transform_5, window_bounds = array<i64: 1, 64>}, {pipeline_mode = #tpu.pipeline_mode<synchronous>, transform_indices = @transform_6, window_bounds = array<i64: 1, 64>}, {transform_indices = @transform_7, window_bounds = array<i64: 1, 32, 64>}]} {
    %c0_i32 = arith.constant 0 : i32
    %0 = arith.cmpi eq, %arg2, %c0_i32 : i32
    %1 = arith.extui %0 : i1 to i32
    %c0_i32_0 = arith.constant 0 : i32
    %2 = arith.cmpi ne, %1, %c0_i32_0 : i32
    scf.if %2 {
      %c0_21 = arith.constant 0 : index
      %c0_22 = arith.constant 0 : index
      %c0_23 = arith.constant 0 : index
      %36 = vector.load %arg3[%c0_21, %c0_22, %c0_23] : memref<1x32x64xf32, #tpu.memory_space<vmem>>, vector<1x32x64xf32>
      %37 = vector.shape_cast %36 : vector<1x32x64xf32> to vector<32x64xf32>
      %38 = arith.truncf %37 : vector<32x64xf32> to vector<32x64xbf16>
      %c0_24 = arith.constant 0 : index
      %c0_25 = arith.constant 0 : index
      %39 = vector.load %arg6[%c0_24, %c0_25] : memref<64x64xbf16, #tpu.memory_space<vmem>>, vector<64x64xbf16>
      %cst_26 = arith.constant dense<0.000000e+00> : vector<32x64xf32>
      %40 = tpu.matmul %38, %39, %cst_26 {dimension_numbers = #tpu.dot_dimension_numbers<[1], [0], [0], [1], [0, 0, 1, 1], [], []>} : vector<32x64xbf16>, vector<64x64xbf16>, vector<32x64xf32> -> vector<32x64xf32>
      %c0_27 = arith.constant 0 : index
      %c0_28 = arith.constant 0 : index
      %41 = vector.load %arg8[%c0_27, %c0_28] : memref<1x64xf32, #tpu.memory_space<vmem>>, vector<1x64xf32>
      %42 = vector.broadcast %41 : vector<1x64xf32> to vector<32x64xf32>
      %43 = arith.addf %40, %42 : vector<32x64xf32>
      %44 = arith.truncf %43 : vector<32x64xf32> to vector<32x64xbf16>
      %c0_29 = arith.constant 0 : index
      %c0_30 = arith.constant 0 : index
      %45 = vector.load %arg11[%c0_29, %c0_30] : memref<32x64xbf16, #tpu.memory_space<vmem>>, vector<32x64xbf16>
      tpu.vector_store %arg11[%c0_29, %c0_30], %44 {strides = array<i32>} : memref<32x64xbf16, #tpu.memory_space<vmem>>, vector<32x64xbf16>,
      %cst_31 = arith.constant 0xFF800000 : f32
      %46 = vector.broadcast %cst_31 : f32 to vector<32x1xf32>
      %c0_32 = arith.constant 0 : index
      %c0_33 = arith.constant 0 : index
      %47 = vector.load %arg12[%c0_32, %c0_33] : memref<32x1xf32, #tpu.memory_space<vmem>>, vector<32x1xf32>
      tpu.vector_store %arg12[%c0_32, %c0_33], %46 {strides = array<i32>} : memref<32x1xf32, #tpu.memory_space<vmem>>, vector<32x1xf32>,
      %cst_34 = arith.constant 0.000000e+00 : f32
      %48 = vector.broadcast %cst_34 : f32 to vector<32x1xf32>
      %c0_35 = arith.constant 0 : index
      %c0_36 = arith.constant 0 : index
      %49 = vector.load %arg13[%c0_35, %c0_36] : memref<32x1xf32, #tpu.memory_space<vmem>>, vector<32x1xf32>
      tpu.vector_store %arg13[%c0_35, %c0_36], %48 {strides = array<i32>} : memref<32x1xf32, #tpu.memory_space<vmem>>, vector<32x1xf32>,
      %cst_37 = arith.constant 0.000000e+00 : f32
      %50 = vector.broadcast %cst_37 : f32 to vector<32x64xf32>
      %c0_38 = arith.constant 0 : index
      %c0_39 = arith.constant 0 : index
      %51 = vector.load %arg14[%c0_38, %c0_39] : memref<32x64xf32, #tpu.memory_space<vmem>>, vector<32x64xf32>
      tpu.vector_store %arg14[%c0_38, %c0_39], %50 {strides = array<i32>} : memref<32x64xf32, #tpu.memory_space<vmem>>, vector<32x64xf32>,
    } else {
    }
    %c0 = arith.constant 0 : index
    %c0_1 = arith.constant 0 : index
    %c0_2 = arith.constant 0 : index
    %3 = vector.load %arg4[%c0, %c0_1, %c0_2] : memref<1x64x64xbf16, #tpu.memory_space<vmem>>, vector<1x64x64xbf16>
    %4 = vector.shape_cast %3 : vector<1x64x64xbf16> to vector<64x64xbf16>
    %c0_3 = arith.constant 0 : index
    %c0_4 = arith.constant 0 : index
    %c0_5 = arith.constant 0 : index
    %5 = vector.load %arg5[%c0_3, %c0_4, %c0_5] : memref<1x64x64xbf16, #tpu.memory_space<vmem>>, vector<1x64x64xbf16>
    %6 = vector.shape_cast %5 : vector<1x64x64xbf16> to vector<64x64xbf16>
    %c0_6 = arith.constant 0 : index
    %c0_7 = arith.constant 0 : index
    %7 = vector.load %arg11[%c0_6, %c0_7] : memref<32x64xbf16, #tpu.memory_space<vmem>>, vector<32x64xbf16>
    %cst = arith.constant dense<0.000000e+00> : vector<32x64xf32>
    %8 = tpu.matmul %7, %4, %cst {dimension_numbers = #tpu.dot_dimension_numbers<[1], [1], [0], [0], [0, 0, 1, 0], [], []>} : vector<32x64xbf16>, vector<64x64xbf16>, vector<32x64xf32> -> vector<32x64xf32>
    %c0_8 = arith.constant 0 : index
    %c0_9 = arith.constant 0 : index
    %9 = vector.load %arg12[%c0_8, %c0_9] : memref<32x1xf32, #tpu.memory_space<vmem>>, vector<32x1xf32>
    %cst_10 = arith.constant dense<0xFF800000> : vector<32xf32>
    %10 = vector.multi_reduction <maximumf>, %8, %cst_10 [1] : vector<32x64xf32> to vector<32xf32>
    %11 = vector.shape_cast %10 : vector<32xf32> to vector<32x1xf32>
    %12 = arith.maximumf %9, %11 : vector<32x1xf32>
    %13 = arith.subf %9, %12 : vector<32x1xf32>
    %14 = math.exp %13 : vector<32x1xf32>
    %15 = vector.broadcast %12 : vector<32x1xf32> to vector<32x64xf32>
    %16 = arith.subf %8, %15 : vector<32x64xf32>
    %17 = arith.truncf %16 : vector<32x64xf32> to vector<32x64xbf16>
    %18 = math.exp %17 : vector<32x64xbf16>
    %c0_11 = arith.constant 0 : index
    %c0_12 = arith.constant 0 : index
    %19 = vector.load %arg13[%c0_11, %c0_12] : memref<32x1xf32, #tpu.memory_space<vmem>>, vector<32x1xf32>
    %20 = arith.mulf %14, %19 : vector<32x1xf32>
    %21 = arith.extf %18 : vector<32x64xbf16> to vector<32x64xf32>
    %cst_13 = arith.constant dense<0.000000e+00> : vector<32xf32>
    %22 = vector.multi_reduction <add>, %21, %cst_13 [1] : vector<32x64xf32> to vector<32xf32>
    %23 = vector.shape_cast %22 : vector<32xf32> to vector<32x1xf32>
    %24 = arith.addf %20, %23 : vector<32x1xf32>
    %c0_14 = arith.constant 0 : index
    %c0_15 = arith.constant 0 : index
    %25 = vector.load %arg14[%c0_14, %c0_15] : memref<32x64xf32, #tpu.memory_space<vmem>>, vector<32x64xf32>
    %26 = vector.broadcast %14 : vector<32x1xf32> to vector<32x64xf32>
    %27 = arith.mulf %26, %25 : vector<32x64xf32>
    %cst_16 = arith.constant dense<0.000000e+00> : vector<32x64xf32>
    %28 = tpu.matmul %18, %6, %cst_16 {dimension_numbers = #tpu.dot_dimension_numbers<[1], [0], [0], [1], [0, 0, 1, 1], [], []>} : vector<32x64xbf16>, vector<64x64xbf16>, vector<32x64xf32> -> vector<32x64xf32>
    %29 = arith.addf %27, %28 : vector<32x64xf32>
    %c0_i32_17 = arith.constant 0 : i32
    %30 = arith.cmpi slt, %arg2, %c0_i32_17 : i32
    %31 = arith.extui %30 : i1 to i32
    %c0_i32_18 = arith.constant 0 : i32
    %32 = arith.cmpi ne, %31, %c0_i32_18 : i32
    scf.if %32 {
      %c0_21 = arith.constant 0 : index
      %c0_22 = arith.constant 0 : index
      %36 = vector.load %arg12[%c0_21, %c0_22] : memref<32x1xf32, #tpu.memory_space<vmem>>, vector<32x1xf32>
      tpu.vector_store %arg12[%c0_21, %c0_22], %12 {strides = array<i32>} : memref<32x1xf32, #tpu.memory_space<vmem>>, vector<32x1xf32>,
      %c0_23 = arith.constant 0 : index
      %c0_24 = arith.constant 0 : index
      %37 = vector.load %arg13[%c0_23, %c0_24] : memref<32x1xf32, #tpu.memory_space<vmem>>, vector<32x1xf32>
      tpu.vector_store %arg13[%c0_23, %c0_24], %24 {strides = array<i32>} : memref<32x1xf32, #tpu.memory_space<vmem>>, vector<32x1xf32>,
      %c0_25 = arith.constant 0 : index
      %c0_26 = arith.constant 0 : index
      %38 = vector.load %arg14[%c0_25, %c0_26] : memref<32x64xf32, #tpu.memory_space<vmem>>, vector<32x64xf32>
      tpu.vector_store %arg14[%c0_25, %c0_26], %29 {strides = array<i32>} : memref<32x64xf32, #tpu.memory_space<vmem>>, vector<32x64xf32>,
    } else {
    }
    %c0_i32_19 = arith.constant 0 : i32
    %33 = arith.cmpi eq, %arg2, %c0_i32_19 : i32
    %34 = arith.extui %33 : i1 to i32
    %c0_i32_20 = arith.constant 0 : i32
    %35 = arith.cmpi ne, %34, %c0_i32_20 : i32
    scf.if %35 {
      %36 = tpu.reciprocal %24 {approx = true} : vector<32x1xf32> -> vector<32x1xf32>
      %37 = vector.broadcast %36 : vector<32x1xf32> to vector<32x64xf32>
      %38 = arith.mulf %29, %37 : vector<32x64xf32>
      %39 = arith.truncf %38 : vector<32x64xf32> to vector<32x64xbf16>
      %c0_21 = arith.constant 0 : index
      %c0_22 = arith.constant 0 : index
      %40 = vector.load %arg7[%c0_21, %c0_22] : memref<64x64xbf16, #tpu.memory_space<vmem>>, vector<64x64xbf16>
      %cst_23 = arith.constant dense<0.000000e+00> : vector<32x64xf32>
      %41 = tpu.matmul %39, %40, %cst_23 {dimension_numbers = #tpu.dot_dimension_numbers<[1], [0], [0], [1], [0, 0, 1, 1], [], []>} : vector<32x64xbf16>, vector<64x64xbf16>, vector<32x64xf32> -> vector<32x64xf32>
      %c0_24 = arith.constant 0 : index
      %c0_25 = arith.constant 0 : index
      %42 = vector.load %arg9[%c0_24, %c0_25] : memref<1x64xf32, #tpu.memory_space<vmem>>, vector<1x64xf32>
      %43 = vector.broadcast %42 : vector<1x64xf32> to vector<32x64xf32>
      %44 = arith.addf %41, %43 : vector<32x64xf32>
      %c0_26 = arith.constant 0 : index
      %c0_27 = arith.constant 0 : index
      %c0_28 = arith.constant 0 : index
      %45 = vector.load %arg3[%c0_26, %c0_27, %c0_28] : memref<1x32x64xf32, #tpu.memory_space<vmem>>, vector<1x32x64xf32>
      %46 = vector.shape_cast %45 : vector<1x32x64xf32> to vector<32x64xf32>
      %47 = arith.addf %46, %44 : vector<32x64xf32>
      %c0_29 = arith.constant 0 : index
      %c0_30 = arith.constant 0 : index
      %c0_31 = arith.constant 0 : index
      %48 = vector.load %arg10[%c0_29, %c0_30, %c0_31] : memref<1x32x64xf32, #tpu.memory_space<vmem>>, vector<1x32x64xf32>
      %49 = vector.shape_cast %48 : vector<1x32x64xf32> to vector<32x64xf32>
      %50 = vector.shape_cast %47 : vector<32x64xf32> to vector<1x32x64xf32>
      tpu.vector_store %arg10[%c0_29, %c0_30, %c0_31], %50 {strides = array<i32>} : memref<1x32x64xf32, #tpu.memory_space<vmem>>, vector<1x32x64xf32>,
    } else {
    }
    return
  }
  func.func @transform_0(%arg0: i32, %arg1: i32, %arg2: i32) -> (i32, i32, i32) {
    %c0_i32 = arith.constant 0 : i32
    %c0_i32_0 = arith.constant 0 : i32
    return %arg0, %arg1, %c0_i32 : i32, i32, i32
  }
  func.func @transform_1(%arg0: i32, %arg1: i32, %arg2: i32) -> (i32, i32, i32) {
    %c0_i32 = arith.constant 0 : i32
    %c0_i32_0 = arith.constant 0 : i32
    return %arg0, %arg2, %c0_i32 : i32, i32, i32
  }
  func.func @transform_2(%arg0: i32, %arg1: i32, %arg2: i32) -> (i32, i32, i32) {
    %c0_i32 = arith.constant 0 : i32
    %c0_i32_0 = arith.constant 0 : i32
    return %arg0, %arg2, %c0_i32 : i32, i32, i32
  }
  func.func @transform_3(%arg0: i32, %arg1: i32, %arg2: i32) -> (i32, i32) {
    %c0_i32 = arith.constant 0 : i32
    %c0_i32_0 = arith.constant 0 : i32
    %c0_i32_1 = arith.constant 0 : i32
    return %c0_i32, %c0_i32_0 : i32, i32
  }
  func.func @transform_4(%arg0: i32, %arg1: i32, %arg2: i32) -> (i32, i32) {
    %c0_i32 = arith.constant 0 : i32
    %c0_i32_0 = arith.constant 0 : i32
    %c0_i32_1 = arith.constant 0 : i32
    return %c0_i32, %c0_i32_0 : i32, i32
  }
  func.func @transform_5(%arg0: i32, %arg1: i32, %arg2: i32) -> (i32, i32) {
    %c0_i32 = arith.constant 0 : i32
    %c0_i32_0 = arith.constant 0 : i32
    %c0_i32_1 = arith.constant 0 : i32
    return %c0_i32, %c0_i32_0 : i32, i32
  }
  func.func @transform_6(%arg0: i32, %arg1: i32, %arg2: i32) -> (i32, i32) {
    %c0_i32 = arith.constant 0 : i32
    %c0_i32_0 = arith.constant 0 : i32
    %c0_i32_1 = arith.constant 0 : i32
    return %c0_i32, %c0_i32_0 : i32, i32
  }
  func.func @transform_7(%arg0: i32, %arg1: i32, %arg2: i32) -> (i32, i32, i32) {
    %c0_i32 = arith.constant 0 : i32
    %c0_i32_0 = arith.constant 0 : i32
    return %arg0, %arg1, %c0_i32 : i32, i32, i32
  }
}

</mosaic_0001>

<llo_original>
// kernel: tpu_custom_call.1
$region0: #{tpu_custom_call.1}
  #allocation0 [shape = 'u32[]', space=smem, size = 0x4, offset = 0x4, fixed_abs, tag = 'smem constant byte address 0x4 - core index']
  #allocation1 [shape = 'u32[144,128]{1,0:T(1,128)}', space=vmem, size = 0x12000, scoped, tag = 'internal scratch']
  #allocation2 [shape = 'bf16[32,64]{1,0:T(8,128)(2,1)}', space=vmem, size = 0x2000, scoped, tag = 'scratch operand']
  #allocation3 [shape = 'f32[32,1]{1,0:T(8,128)}', space=vmem, size = 0x4000, scoped, tag = 'scratch operand']
  #allocation4 [shape = 'f32[32,1]{1,0:T(8,128)}', space=vmem, size = 0x4000, scoped, tag = 'scratch operand']
  #allocation5 [shape = 'f32[32,64]{1,0:T(8,128)}', space=vmem, size = 0x4000, scoped, tag = 'scratch operand']
  %s0 = inlined_call_operand.hbm [shape: f32[1,64,64], index: 0, kind: input, shape index: {}]
  %s1 = inlined_call_operand.hbm [shape: bf16[1,64,64], index: 1, kind: input, shape index: {}]
  %s2 = inlined_call_operand.hbm [shape: bf16[1,64,64], index: 2, kind: input, shape index: {}]
  %s3 = inlined_call_operand.hbm [shape: bf16[64,64], index: 3, kind: input, shape index: {}]
  %s4 = inlined_call_operand.hbm [shape: bf16[64,64], index: 4, kind: input, shape index: {}]
  %s5 = inlined_call_operand.vmem [shape: f32[1,64], index: 5, kind: input, shape index: {}]
  %s6 = inlined_call_operand.vmem [shape: f32[1,64], index: 6, kind: input, shape index: {}]
  %s7 = inlined_call_operand.hbm [shape: f32[1,64,64], index: 7, kind: output, shape index: {}]
  %s8 = sld [smem:[#allocation0]]
  $region93: #{tpu_custom_call.1} parent=0
    _
  %s10 = ssub.s32 1, %s8
  %s11 = scalar_select 0, %s10, %s8
  $region1: #{tpu_custom_call.1} parent=0
    #allocation6 [shape = 'u8[32768]{0}', space=vmem, size = 0x8000, scoped, tag = 'input window, operand 0']
    #allocation7 [shape = 's32[2]{0}', space=sflag, size = 0x8, scoped, tag = 'scoped memory for tpu_custom_call.1']
    #allocation8 [shape = 's32[2]{0}', space=sflag, size = 0x8, scoped, tag = 'scoped memory for tpu_custom_call.1']
    #allocation9 [shape = 'u8[16384]{0}', space=vmem, size = 0x4000, scoped, tag = 'input window, operand 1, single buffered']
    #allocation10 [shape = 's32[1]{0}', space=sflag, size = 0x4, scoped, tag = 'scoped memory for tpu_custom_call.1']
    #allocation11 [shape = 'u8[16384]{0}', space=vmem, size = 0x4000, scoped, tag = 'input window, operand 2, single buffered']
    #allocation12 [shape = 'u8[16384]{0}', space=vmem, size = 0x4000, scoped, tag = 'input window, operand 3, single buffered']
    #allocation13 [shape = 's32[1]{0}', space=sflag, size = 0x4, scoped, tag = 'scoped memory for tpu_custom_call.1']
    #allocation14 [shape = 'u8[16384]{0}', space=vmem, size = 0x4000, scoped, tag = 'input window, operand 4, single buffered']
    #allocation15 [shape = 'u8[32768]{0}', space=vmem, size = 0x8000, scoped, tag = 'output window, operand 0']
    %12 = vsyncpa [#allocation7], 0
    %s13 = scalar_lea.sflag [#allocation7], 1
    %14 = vsyncpa %s13, 0
    %15 = vsyncpa [#allocation10], 0
    %16 = vsyncpa [#allocation13], 0
    %17 = vsyncpa [#allocation8], 0
    %s18 = scalar_lea.sflag [#allocation8], 1
    %19 = vsyncpa %s18, 0
    loop: start=0, step=1, limit=4
    $region2: #{tpu_custom_call.1} parent=1 // loop_pre_header
      _
    $region3: #{tpu_custom_call.1} parent=1 // loop_header
      %s21 = sphi 0, %s25
      %p22 = scmp.ge.s32.totalorder %s21, 4
      %s28 = sphi 0, %s47
      %s29 = sphi 0, %s43
      %s30 = sphi 0, %s39
      %s31 = sphi 0, %s28
      %s32 = sphi 0, %s29
      %s33 = sphi 0, %s30
      %s34 = sphi 0, %s31
      %s35 = sphi 0, %s32
      %s36 = sphi 0, %s33
      %s52 = sphi 0, %s54
      %s55 = sphi 0, %s52
      %s56 = sphi 0, %s55
      %s72 = sphi 0, %s56
      %s80 = sphi 0, %s82
      %s83 = sphi 0, %s80
      %s84 = sphi 0, %s83
      %s100 = sphi 0, %s84
      %s108 = sphi 0, %s110
      %s111 = sphi 0, %s108
      %s112 = sphi 0, %s111
      %s128 = sphi 0, %s112
      %s132 = sphi 0, %s132
      %s134 = sphi 0, %s132
      %s135 = sphi 0, %s134
      %s149 = sphi 0, %s135
      %s153 = sphi 0, %s153
      %s155 = sphi 0, %s153
      %s156 = sphi 0, %s155
      %s170 = sphi 0, %s156
      %s174 = sphi 0, %s174
      %s176 = sphi 0, %s174
      %s177 = sphi 0, %s176
      %s191 = sphi 0, %s177
      %s195 = sphi 0, %s195
      %s197 = sphi 0, %s195
      %s198 = sphi 0, %s197
      %s212 = sphi 0, %s198
      %s220 = sphi 0, %s222
      %s223 = sphi 0, %s220
      %s224 = sphi 0, %s223
      %s240 = sphi 0, %s224
    $region4: #{tpu_custom_call.1} parent=1 // loop_header_branch
      %24 = sbr.rel (%p22) target = $region8
    $region5: #{tpu_custom_call.1} parent=1 // loop_body
      %s26 = ssub.s32 %s21, 1
      %s27 = ssub.s32 %s21, 2
      %s37 = sadd.s32 1, %s30
      %p38 = scmp.ge.s32.totalorder %s37, 1
      %s39 = scalar_select %p38, 0, %s37
      %s40 = sadd.s32 1, %s29
      %s41 = scalar_select %p38, %s40, %s29
      %p42 = scmp.ge.s32.totalorder %s41, 2
      %s43 = scalar_select %p42, 0, %s41
      %s44 = sadd.s32 1, %s28
      %s45 = scalar_select %p42, %s44, %s28
      %p46 = scmp.ge.s32.totalorder %s45, 1
      %s47 = scalar_select %p46, 0, %s45
      %s48 = ssub.s32 %s28, %s47
      %s49 = ssub.s32 %s29, %s43
      %s50 = sor.u32 %s48, %s49
      %p51 = scmp.eq.s32.totalorder %s50, 0
      %s53 = sadd.s32 %s52, 1
      %s54 = scalar_select %p51, %s52, %s53
      %p57 = pneg %p51
      %p58 = scmp.eq.s32.totalorder %s21, 1
      %p59 = por %p57, %p58
      %p60 = scmp.ne.s32.totalorder %s52, %s55
      %p61 = scmp.eq.s32.totalorder %s21, 0
      %p62 = por %p60, %p61
      %p63 = scmp.ne.s32.totalorder %s52, %s55
      %p64 = scmp.eq.s32.totalorder %s26, 1
      %p65 = por %p63, %p64
      %p66 = scmp.ne.s32.totalorder %s55, %s56
      %p67 = scmp.eq.s32.totalorder %s26, 0
      %p68 = por %p66, %p67
      %p69 = scmp.ne.s32.totalorder %s55, %s56
      %p70 = scmp.eq.s32.totalorder %s27, 1
      %p71 = por %p69, %p70
      %p73 = scmp.ne.s32.totalorder %s56, %s72
      %p74 = scmp.eq.s32.totalorder %s27, 0
      %p75 = por %p73, %p74
      %s76 = ssub.s32 %s28, %s47
      %s77 = ssub.s32 %s30, %s39
      %s78 = sor.u32 %s76, %s77
      %p79 = scmp.eq.s32.totalorder %s78, 0
      %s81 = sadd.s32 %s80, 1
      %s82 = scalar_select %p79, %s80, %s81
      %p85 = pneg %p79
      %p86 = scmp.eq.s32.totalorder %s21, 1
      %p87 = por %p85, %p86
      %p88 = scmp.ne.s32.totalorder %s80, %s83
      %p89 = scmp.eq.s32.totalorder %s21, 0
      %p90 = por %p88, %p89
      %p91 = scmp.ne.s32.totalorder %s80, %s83
      %p92 = scmp.eq.s32.totalorder %s26, 1
      %p93 = por %p91, %p92
      %p94 = scmp.ne.s32.totalorder %s83, %s84
      %p95 = scmp.eq.s32.totalorder %s26, 0
      %p96 = por %p94, %p95
      %p97 = scmp.ne.s32.totalorder %s83, %s84
      %p98 = scmp.eq.s32.totalorder %s27, 1
      %p99 = por %p97, %p98
      %p101 = scmp.ne.s32.totalorder %s84, %s100
      %p102 = scmp.eq.s32.totalorder %s27, 0
      %p103 = por %p101, %p102
      %s104 = ssub.s32 %s28, %s47
      %s105 = ssub.s32 %s30, %s39
      %s106 = sor.u32 %s104, %s105
      %p107 = scmp.eq.s32.totalorder %s106, 0
      %s109 = sadd.s32 %s108, 1
      %s110 = scalar_select %p107, %s108, %s109
      %p113 = pneg %p107
      %p114 = scmp.eq.s32.totalorder %s21, 1
      %p115 = por %p113, %p114
      %p116 = scmp.ne.s32.totalorder %s108, %s111
      %p117 = scmp.eq.s32.totalorder %s21, 0
      %p118 = por %p116, %p117
      %p119 = scmp.ne.s32.totalorder %s108, %s111
      %p120 = scmp.eq.s32.totalorder %s26, 1
      %p121 = por %p119, %p120
      %p122 = scmp.ne.s32.totalorder %s111, %s112
      %p123 = scmp.eq.s32.totalorder %s26, 0
      %p124 = por %p122, %p123
      %p125 = scmp.ne.s32.totalorder %s111, %s112
      %p126 = scmp.eq.s32.totalorder %s27, 1
      %p127 = por %p125, %p126
      %p129 = scmp.ne.s32.totalorder %s112, %s128
      %p130 = scmp.eq.s32.totalorder %s27, 0
      %p131 = por %p129, %p130
      %s133 = sadd.s32 %s132, 1
      %p136 = scmp.eq.s32.totalorder %s21, 1
      %p137 = scmp.ne.s32.totalorder %s132, %s134
      %p138 = scmp.eq.s32.totalorder %s21, 0
      %p139 = por %p137, %p138
      %p140 = scmp.ne.s32.totalorder %s132, %s134
      %p141 = scmp.eq.s32.totalorder %s26, 1
      %p142 = por %p140, %p141
      %p143 = scmp.ne.s32.totalorder %s134, %s135
      %p144 = scmp.eq.s32.totalorder %s26, 0
      %p145 = por %p143, %p144
      %p146 = scmp.ne.s32.totalorder %s134, %s135
      %p147 = scmp.eq.s32.totalorder %s27, 1
      %p148 = por %p146, %p147
      %p150 = scmp.ne.s32.totalorder %s135, %s149
      %p151 = scmp.eq.s32.totalorder %s27, 0
      %p152 = por %p150, %p151
      %s154 = sadd.s32 %s153, 1
      %p157 = scmp.eq.s32.totalorder %s21, 1
      %p158 = scmp.ne.s32.totalorder %s153, %s155
      %p159 = scmp.eq.s32.totalorder %s21, 0
      %p160 = por %p158, %p159
      %p161 = scmp.ne.s32.totalorder %s153, %s155
      %p162 = scmp.eq.s32.totalorder %s26, 1
      %p163 = por %p161, %p162
      %p164 = scmp.ne.s32.totalorder %s155, %s156
      %p165 = scmp.eq.s32.totalorder %s26, 0
      %p166 = por %p164, %p165
      %p167 = scmp.ne.s32.totalorder %s155, %s156
      %p168 = scmp.eq.s32.totalorder %s27, 1
      %p169 = por %p167, %p168
      %p171 = scmp.ne.s32.totalorder %s156, %s170
      %p172 = scmp.eq.s32.totalorder %s27, 0
      %p173 = por %p171, %p172
      %s175 = sadd.s32 %s174, 1
      %p178 = scmp.eq.s32.totalorder %s21, 1
      %p179 = scmp.ne.s32.totalorder %s174, %s176
      %p180 = scmp.eq.s32.totalorder %s21, 0
      %p181 = por %p179, %p180
      %p182 = scmp.ne.s32.totalorder %s174, %s176
      %p183 = scmp.eq.s32.totalorder %s26, 1
      %p184 = por %p182, %p183
      %p185 = scmp.ne.s32.totalorder %s176, %s177
      %p186 = scmp.eq.s32.totalorder %s26, 0
      %p187 = por %p185, %p186
      %p188 = scmp.ne.s32.totalorder %s176, %s177
      %p189 = scmp.eq.s32.totalorder %s27, 1
      %p190 = por %p188, %p189
      %p192 = scmp.ne.s32.totalorder %s177, %s191
      %p193 = scmp.eq.s32.totalorder %s27, 0
      %p194 = por %p192, %p193
      %s196 = sadd.s32 %s195, 1
      %p199 = scmp.eq.s32.totalorder %s21, 1
      %p200 = scmp.ne.s32.totalorder %s195, %s197
      %p201 = scmp.eq.s32.totalorder %s21, 0
      %p202 = por %p200, %p201
      %p203 = scmp.ne.s32.totalorder %s195, %s197
      %p204 = scmp.eq.s32.totalorder %s26, 1
      %p205 = por %p203, %p204
      %p206 = scmp.ne.s32.totalorder %s197, %s198
      %p207 = scmp.eq.s32.totalorder %s26, 0
      %p208 = por %p206, %p207
      %p209 = scmp.ne.s32.totalorder %s197, %s198
      %p210 = scmp.eq.s32.totalorder %s27, 1
      %p211 = por %p209, %p210
      %p213 = scmp.ne.s32.totalorder %s198, %s212
      %p214 = scmp.eq.s32.totalorder %s27, 0
      %p215 = por %p213, %p214
      %s216 = ssub.s32 %s28, %s47
      %s217 = ssub.s32 %s29, %s43
      %s218 = sor.u32 %s216, %s217
      %p219 = scmp.eq.s32.totalorder %s218, 0
      %s221 = sadd.s32 %s220, 1
      %s222 = scalar_select %p219, %s220, %s221
      %p225 = pneg %p219
      %p226 = scmp.eq.s32.totalorder %s21, 1
      %p227 = por %p225, %p226
      %p228 = scmp.ne.s32.totalorder %s220, %s223
      %p229 = scmp.eq.s32.totalorder %s21, 0
      %p230 = por %p228, %p229
      %p231 = scmp.ne.s32.totalorder %s220, %s223
      %p232 = scmp.eq.s32.totalorder %s26, 1
      %p233 = por %p231, %p232
      %p234 = scmp.ne.s32.totalorder %s223, %s224
      %p235 = scmp.eq.s32.totalorder %s26, 0
      %p236 = por %p234, %p235
      %p237 = scmp.ne.s32.totalorder %s223, %s224
      %p238 = scmp.eq.s32.totalorder %s27, 1
      %p239 = por %p237, %p238
      %p241 = scmp.ne.s32.totalorder %s224, %s240
      %p242 = scmp.eq.s32.totalorder %s27, 0
      %p243 = por %p241, %p242
      %p244 = scmp.le.s32.totalorder 1, %s21
      %p245 = scmp.lt.s32.totalorder %s21, 3
      %p246 = pnand %p244, %p245
      %p247 = pneg %p246
      // Predicated region
      $region9: #{tpu_custom_call.1} parent=5 // pred_check
        _
      $region10: #{tpu_custom_call.1} parent=5 // pred_check_branch
        %249 = sbr.rel (%p246) target = $region12
      $region11: #{tpu_custom_call.1} parent=5 // pred_region
        %s250 = ssub.s32 %s21, 1
        // Predicated region
        $region13: #{tpu_custom_call.1} parent=11 // pred_check
          %p251 = pneg %p96
        $region14: #{tpu_custom_call.1} parent=11 // pred_check_branch
          %253 = sbr.rel (%p251) target = $region16
        $region15: #{tpu_custom_call.1} parent=11 // pred_region
          %s254 = smul.u32 8, %s33
          %s256 = ssub.s32 512, 512
          %257 = vsyncadd [#allocation10], %s256
          %s258 = smul.addr %s31, 8
          %s259 = sadd.s32 %s254, %s258
          %s260 = smul.addr %s259, 64
          %s261 = scalar_lea.hbm %s1, %s260
          %s262 = sshll.u32 [#allocation9], 4
          %s263 = int_to_ptr.vmem [resolvable:$true] %s262
          %268 = dma.hbm_to_vmem [thread:$0]  %s261, 512, %s263, [#allocation10], 64, 64, 4
        $region16: #{tpu_custom_call.1} parent=11 // pred_fallthru
          _
        // Predicated region
        $region17: #{tpu_custom_call.1} parent=11 // pred_check
          %p269 = pneg %p124
        $region18: #{tpu_custom_call.1} parent=11 // pred_check_branch
          %271 = sbr.rel (%p269) target = $region20
        $region19: #{tpu_custom_call.1} parent=11 // pred_region
          %s272 = smul.u32 8, %s33
          %s274 = ssub.s32 512, 512
          %275 = vsyncadd [#allocation10], %s274
          %s276 = smul.addr %s31, 8
          %s277 = sadd.s32 %s272, %s276
          %s278 = smul.addr %s277, 64
          %s279 = scalar_lea.hbm %s2, %s278
          %s280 = sshll.u32 [#allocation11], 4
          %s281 = int_to_ptr.vmem [resolvable:$true] %s280
          %286 = dma.hbm_to_vmem [thread:$0]  %s279, 512, %s281, [#allocation10], 64, 64, 4
        $region20: #{tpu_custom_call.1} parent=11 // pred_fallthru
          _
        // Predicated region
        $region21: #{tpu_custom_call.1} parent=11 // pred_check
          %p287 = pneg %p145
        $region22: #{tpu_custom_call.1} parent=11 // pred_check_branch
          %289 = sbr.rel (%p287) target = $region24
        $region23: #{tpu_custom_call.1} parent=11 // pred_region
          %s291 = ssub.s32 512, 512
          %292 = vsyncadd [#allocation13], %s291
          %s293 = sshll.u32 [#allocation12], 4
          %s294 = int_to_ptr.vmem [resolvable:$true] %s293
          %299 = dma.hbm_to_vmem [thread:$0]  %s3, 512, %s294, [#allocation13], 64, 64, 4
        $region24: #{tpu_custom_call.1} parent=11 // pred_fallthru
          _
        // Predicated region
        $region25: #{tpu_custom_call.1} parent=11 // pred_check
          %p300 = pneg %p166
        $region26: #{tpu_custom_call.1} parent=11 // pred_check_branch
          %302 = sbr.rel (%p300) target = $region28
        $region27: #{tpu_custom_call.1} parent=11 // pred_region
          %s304 = ssub.s32 512, 512
          %305 = vsyncadd [#allocation13], %s304
          %s306 = sshll.u32 [#allocation14], 4
          %s307 = int_to_ptr.vmem [resolvable:$true] %s306
          %312 = dma.hbm_to_vmem [thread:$0]  %s4, 512, %s307, [#allocation13], 64, 64, 4
        $region28: #{tpu_custom_call.1} parent=11 // pred_fallthru
          _
        // Predicated region
        $region29: #{tpu_custom_call.1} parent=11 // pred_check
          %p313 = pneg %p187
        $region30: #{tpu_custom_call.1} parent=11 // pred_check_branch
          %315 = sbr.rel (%p313) target = $region32
        $region31: #{tpu_custom_call.1} parent=11 // pred_region
          _
        $region32: #{tpu_custom_call.1} parent=11 // pred_fallthru
          _
        // Predicated region
        $region33: #{tpu_custom_call.1} parent=11 // pred_check
          %p316 = pneg %p208
        $region34: #{tpu_custom_call.1} parent=11 // pred_check_branch
          %318 = sbr.rel (%p316) target = $region36
        $region35: #{tpu_custom_call.1} parent=11 // pred_region
          _
        $region36: #{tpu_custom_call.1} parent=11 // pred_fallthru
          _
      $region12: #{tpu_custom_call.1} parent=5 // pred_fallthru
        _
      %p319 = scmp.lt.s32.totalorder %s21, 2
      // Predicated region
      $region37: #{tpu_custom_call.1} parent=5 // pred_check
        %p320 = pneg %p319
      $region38: #{tpu_custom_call.1} parent=5 // pred_check_branch
        %322 = sbr.rel (%p320) target = $region40
      $region39: #{tpu_custom_call.1} parent=5 // pred_region
        // Predicated region
        $region41: #{tpu_custom_call.1} parent=39 // pred_check
          %p323 = pneg %p62
        $region42: #{tpu_custom_call.1} parent=39 // pred_check_branch
          %325 = sbr.rel (%p323) target = $region44
        $region43: #{tpu_custom_call.1} parent=39 // pred_region
          %s326 = sand.u32 %s52, 1
          %s327 = scalar_lea.sflag [#allocation7], %s326
          %s328 = sand.u32 %s52, 1
          %s329 = smul.addr %s328, 32
          %s330 = scalar_lea.vmem [#allocation6], %s329
          %s331 = smul.u32 4, %s29
          %s333 = ssub.s32 512, 512
          %334 = vsyncadd %s327, %s333
          %s335 = smul.addr %s28, 8
          %s336 = sadd.s32 %s331, %s335
          %s337 = smul.addr %s336, 128
          %s338 = scalar_lea.hbm %s0, %s337
          %s339 = sshll.u32 %s330, 4
          %s340 = int_to_ptr.vmem [resolvable:$true] %s339
          %345 = dma.hbm_to_vmem [thread:$0]  %s338, 512, %s340, %s327, 128, 128, 8
        $region44: #{tpu_custom_call.1} parent=39 // pred_fallthru
          _
      $region40: #{tpu_custom_call.1} parent=5 // pred_fallthru
        _
      %p346 = scmp.le.s32.totalorder 1, %s21
      %p347 = scmp.lt.s32.totalorder %s21, 3
      %p348 = pnand %p346, %p347
      %p349 = pneg %p348
      // Predicated region
      $region45: #{tpu_custom_call.1} parent=5 // pred_check
        _
      $region46: #{tpu_custom_call.1} parent=5 // pred_check_branch
        %351 = sbr.rel (%p348) target = $region48
      $region47: #{tpu_custom_call.1} parent=5 // pred_region
        %s352 = ssub.s32 %s21, 1
        %s353 = sand.u32 %s55, 1
        %s354 = scalar_lea.sflag [#allocation7], %s353
        %s355 = sand.u32 %s55, 1
        %s356 = smul.addr %s355, 32
        %s357 = scalar_lea.vmem [#allocation6], %s356
        // Predicated region
        $region49: #{tpu_custom_call.1} parent=47 // pred_check
          %p358 = pneg %p68
        $region50: #{tpu_custom_call.1} parent=47 // pred_check_branch
          %360 = sbr.rel (%p358) target = $region52
        $region51: #{tpu_custom_call.1} parent=47 // pred_region
          %361 = dma.done %s354, 512
        $region52: #{tpu_custom_call.1} parent=47 // pred_fallthru
          _
        // Predicated region
        $region53: #{tpu_custom_call.1} parent=47 // pred_check
          %p362 = pneg %p96
        $region54: #{tpu_custom_call.1} parent=47 // pred_check_branch
          %364 = sbr.rel (%p362) target = $region56
        $region55: #{tpu_custom_call.1} parent=47 // pred_region
          %365 = dma.done [#allocation10], 512
        $region56: #{tpu_custom_call.1} parent=47 // pred_fallthru
          _
        // Predicated region
        $region57: #{tpu_custom_call.1} parent=47 // pred_check
          %p366 = pneg %p124
        $region58: #{tpu_custom_call.1} parent=47 // pred_check_branch
          %368 = sbr.rel (%p366) target = $region60
        $region59: #{tpu_custom_call.1} parent=47 // pred_region
          %369 = dma.done [#allocation10], 512
        $region60: #{tpu_custom_call.1} parent=47 // pred_fallthru
          _
        // Predicated region
        $region61: #{tpu_custom_call.1} parent=47 // pred_check
          %p370 = pneg %p145
        $region62: #{tpu_custom_call.1} parent=47 // pred_check_branch
          %372 = sbr.rel (%p370) target = $region64
        $region63: #{tpu_custom_call.1} parent=47 // pred_region
          %373 = dma.done [#allocation13], 512
        $region64: #{tpu_custom_call.1} parent=47 // pred_fallthru
          _
        // Predicated region
        $region65: #{tpu_custom_call.1} parent=47 // pred_check
          %p374 = pneg %p166
        $region66: #{tpu_custom_call.1} parent=47 // pred_check_branch
          %376 = sbr.rel (%p374) target = $region68
        $region67: #{tpu_custom_call.1} parent=47 // pred_region
          %377 = dma.done [#allocation13], 512
        $region68: #{tpu_custom_call.1} parent=47 // pred_fallthru
          _
        %s378 = sand.u32 %s55, 1
        %s379 = scalar_lea.sflag [#allocation7], %s378
        %s380 = sand.u32 %s55, 1
        %s381 = smul.addr %s380, 32
        %s382 = scalar_lea.vmem [#allocation6], %s381
        %p383 = pneg %p68
        %p384 = pneg %p65
        %p385 = pneg %p96
        %p386 = pneg %p93
        %p387 = pneg %p124
        %p388 = pneg %p121
        %p389 = pneg %p145
        %p390 = pneg %p142
        %p391 = pneg %p166
        %p392 = pneg %p163
        %p393 = pneg %p187
        %p394 = pneg %p184
        %p395 = pneg %p208
        %p396 = pneg %p205
        %p397 = pneg %p236
        %p398 = pneg %p233
        %s399 = sand.u32 %s223, 1
        %s400 = scalar_lea.sflag [#allocation8], %s399
        %s401 = sand.u32 %s223, 1
        %s402 = smul.addr %s401, 32
        %s403 = scalar_lea.vmem [#allocation15], %s402
        %s404 = smul.u32 4, %s32
        %s405 = smul.u32 8, %s33
        %s406 = smul.u32 8, %s33
        %s407 = smul.u32 4, %s32
        %p409 = scmp.eq.s32.totalorder %s33, 0
        // Predicated region
        $region69: #{tpu_custom_call.1} parent=47 // pred_check
          %p410 = pneg %p409
        $region70: #{tpu_custom_call.1} parent=47 // pred_check_branch
          %412 = sbr.rel (%p410) target = $region72
        $region71: #{tpu_custom_call.1} parent=47 // pred_region
          %v413 = vld [vmem:[%s357] sm:$0xff]
          %v414 = vld [vmem:[%s357 + $0x8] sm:$0xff]
          %v415 = vld [vmem:[%s357 + $0x10] sm:$0xff]
          %v416 = vld [vmem:[%s357 + $0x18] sm:$0xff]
          %v417 = vpack.c.bf16 %v414, %v413
          %v418 = vpack.c.bf16 %v416, %v415
          %v419 = vld [vmem:[#allocation12] sm:$0xf]
          %v420 = vld [vmem:[#allocation12 + $0x4] sm:$0xf]
          %v421 = vld [vmem:[#allocation12 + $0x8] sm:$0xf]
          %v422 = vld [vmem:[#allocation12 + $0xc] sm:$0xf]
          %v423 = vld [vmem:[#allocation12 + $0x10] sm:$0xf]
          %v424 = vld [vmem:[#allocation12 + $0x14] sm:$0xf]
          %v425 = vld [vmem:[#allocation12 + $0x18] sm:$0xf]
          %v426 = vld [vmem:[#allocation12 + $0x1c] sm:$0xf]
          %v427 = vld [vmem:[%s5] sm:$0x1]
          %v429 = vlaneseq
          %v430 = vshrl.u32 %v429, 7
          %v431 = vsub.s32 0, %v430
          %v432 = vrot.slane %v427, %v431
          %v442 = vunpack.c.l.b16 %v419
          %v443 = vunpack.c.l.b16 %v420
          %v444 = vunpack.c.l.b16 %v421
          %v445 = vunpack.c.l.b16 %v422
          %v446 = vunpack.c.l.b16 %v423
          %v447 = vunpack.c.l.b16 %v424
          %v448 = vunpack.c.l.b16 %v425
          %v449 = vunpack.c.l.b16 %v426
          %v450 = vpack.c.b16 %v443, %v442
          %v451 = vpack.c.b16 %v445, %v444
          %v452 = vpack.c.b16 %v447, %v446
          %v453 = vpack.c.b16 %v449, %v448
          %vm458 = vcmask 523264
          %v460 = vsel %vm458, %v417, 0
          %v463 = vsel %vm458, %v418, 0
          %465 = vmatprep.subr.bf16.mxu0 0
          %466 = vmatpush1.bf16.msra.mxu0 0
          %467 = vmatprep.subr.bf16.mxu0 0
          %468 = vmatpush1.bf16.msra.mxu0 0
          %469 = vmatprep.subr.bf16.mxu0 0
          %470 = vmatpush1.bf16.msra.mxu0 0
          %471 = vmatprep.subr.bf16.mxu0 0
          %472 = vmatpush1.bf16.msra.mxu0 0
          %473 = vmatprep.subr.bf16.mxu0 0
          %474 = vmatpush1.bf16.msra.mxu0 %v453
          %475 = vmatprep.subr.bf16.mxu0 0
          %476 = vmatpush1.bf16.msra.mxu0 %v452
          %477 = vmatprep.subr.bf16.mxu0 0
          %478 = vmatpush1.bf16.msra.mxu0 %v451
          %479 = vmatprep.subr.bf16.mxu0 0
          %480 = vmatpush1.bf16.msra.mxu0 %v450
          %481 = vmatprep.subr.bf16.mxu0 0
          %482 = vmatpush2.bf16.msra.mxu0 0
          %483 = vmatprep.subr.bf16.mxu0 0
          %484 = vmatpush2.bf16.msra.mxu0 0
          %485 = vmatprep.subr.bf16.mxu0 0
          %486 = vmatpush2.bf16.msra.mxu0 0
          %487 = vmatprep.subr.bf16.mxu0 0
          %488 = vmatpush2.bf16.msra.mxu0 0
          %489 = vmatprep.subr.bf16.mxu0 0
          %490 = vmatpush2.bf16.msra.mxu0 0
          %491 = vmatprep.subr.bf16.mxu0 0
          %492 = vmatpush2.bf16.msra.mxu0 0
          %493 = vmatprep.subr.bf16.mxu0 0
          %494 = vmatpush2.bf16.msra.mxu0 0
          %495 = vmatprep.subr.bf16.mxu0 0
          %496 = vmatpush2.bf16.msra.mxu0 0
          %497 = vmatprep.mubr.bf16.mxu0 0
          %498 = vmatmul.mubr.bf16.gmra.mxu0 %v460
          %v499 = vpop.f32.mrf.mxu0
          %v500 = vadd.f32 %v432, %v499
          %v501 = vpop.f32.mrf.mxu0
          %v502 = vpop.f32.mrf.mxu0
          %v503 = vadd.f32 %v432, %v502
          %v504 = vpop.f32.mrf.mxu0
          %505 = vmatprep.mubr.bf16.mxu0 0
          %506 = vmatmul.mubr.bf16.gmra.mxu0 %v463
          %v507 = vpop.f32.mrf.mxu0
          %v508 = vadd.f32 %v432, %v507
          %v509 = vpop.f32.mrf.mxu0
          %v510 = vpop.f32.mrf.mxu0
          %v511 = vadd.f32 %v432, %v510
          %v512 = vpop.f32.mrf.mxu0
          %513 = vdwg.mxu0
          %v514 = vpack.c.bf16 %v503, %v500
          %v515 = vpack.c.bf16 %v511, %v508
          %v518 = vunpack.c.l.b16 %v514
          %v519 = vunpack.c.h.b16 %v514
          %v520 = vunpack.c.l.b16 %v515
          %v521 = vunpack.c.h.b16 %v515
          %v522 = vpack.c.b16 %v518, %v518
          %v523 = vpack.c.b16 %v519, %v519
          %v524 = vpack.c.b16 %v520, %v520
          %v525 = vpack.c.b16 %v521, %v521
          %vm530 = vcmask 519168
          %531 = vst.msk [vmem:[#allocation2] sm:$0xf] %vm530, %v522
          %532 = vst.msk [vmem:[#allocation2 + $0x4] sm:$0xf] %vm530, %v523
          %533 = vst.msk [vmem:[#allocation2 + $0x8] sm:$0xf] %vm530, %v524
          %534 = vst.msk [vmem:[#allocation2 + $0xc] sm:$0xf] %vm530, %v525
          %vm535 = vcmask 7168
          %536 = vst.msk [vmem:[#allocation3] sm:$0xff] %vm535, -inf
          %537 = vst.msk [vmem:[#allocation3 + $0x8] sm:$0xff] %vm535, -inf
          %538 = vst.msk [vmem:[#allocation3 + $0x10] sm:$0xff] %vm535, -inf
          %539 = vst.msk [vmem:[#allocation3 + $0x18] sm:$0xff] %vm535, -inf
          %540 = vst.msk [vmem:[#allocation4] sm:$0xff] %vm535, 0.0
          %541 = vst.msk [vmem:[#allocation4 + $0x8] sm:$0xff] %vm535, 0.0
          %542 = vst.msk [vmem:[#allocation4 + $0x10] sm:$0xff] %vm535, 0.0
          %543 = vst.msk [vmem:[#allocation4 + $0x18] sm:$0xff] %vm535, 0.0
          %544 = vst.msk [vmem:[#allocation5] sm:$0xff] %vm458, 0.0
          %545 = vst.msk [vmem:[#allocation5 + $0x8] sm:$0xff] %vm458, 0.0
          %546 = vst.msk [vmem:[#allocation5 + $0x10] sm:$0xff] %vm458, 0.0
          %547 = vst.msk [vmem:[#allocation5 + $0x18] sm:$0xff] %vm458, 0.0
        $region72: #{tpu_custom_call.1} parent=47 // pred_fallthru
          _
        %v548 = vld [vmem:[#allocation9] sm:$0xf]
        %v549 = vld [vmem:[#allocation9 + $0x4] sm:$0xf]
        %v550 = vld [vmem:[#allocation9 + $0x8] sm:$0xf]
        %v551 = vld [vmem:[#allocation9 + $0xc] sm:$0xf]
        %v552 = vld [vmem:[#allocation9 + $0x10] sm:$0xf]
        %v553 = vld [vmem:[#allocation9 + $0x14] sm:$0xf]
        %v554 = vld [vmem:[#allocation9 + $0x18] sm:$0xf]
        %v555 = vld [vmem:[#allocation9 + $0x1c] sm:$0xf]
        %v556 = vld [vmem:[#allocation11] sm:$0xf]
        %v557 = vld [vmem:[#allocation11 + $0x4] sm:$0xf]
        %v558 = vld [vmem:[#allocation11 + $0x8] sm:$0xf]
        %v559 = vld [vmem:[#allocation11 + $0xc] sm:$0xf]
        %v560 = vld [vmem:[#allocation11 + $0x10] sm:$0xf]
        %v561 = vld [vmem:[#allocation11 + $0x14] sm:$0xf]
        %v562 = vld [vmem:[#allocation11 + $0x18] sm:$0xf]
        %v563 = vld [vmem:[#allocation11 + $0x1c] sm:$0xf]
        %v564 = vld [vmem:[#allocation2] sm:$0xf]
        %v565 = vld [vmem:[#allocation2 + $0x4] sm:$0xf]
        %v566 = vld [vmem:[#allocation2 + $0x8] sm:$0xf]
        %v567 = vld [vmem:[#allocation2 + $0xc] sm:$0xf]
        %v572 = vunpack.c.l.b16 %v564
        %v573 = vunpack.c.l.b16 %v565
        %v574 = vunpack.c.l.b16 %v566
        %v575 = vunpack.c.l.b16 %v567
        %v576 = vpack.c.b16 %v573, %v572
        %v577 = vpack.c.b16 %v575, %v574
        %v586 = vunpack.c.l.b16 %v548
        %v587 = vunpack.c.l.b16 %v549
        %v588 = vunpack.c.l.b16 %v550
        %v589 = vunpack.c.l.b16 %v551
        %v590 = vunpack.c.l.b16 %v552
        %v591 = vunpack.c.l.b16 %v553
        %v592 = vunpack.c.l.b16 %v554
        %v593 = vunpack.c.l.b16 %v555
        %v594 = vpack.c.b16 %v587, %v586
        %v595 = vpack.c.b16 %v589, %v588
        %v596 = vpack.c.b16 %v591, %v590
        %v597 = vpack.c.b16 %v593, %v592
        %vm598 = vcmask 523264
        %v600 = vsel %vm598, %v576, 0
        %v603 = vsel %vm598, %v577, 0
        %v606 = vsel %vm598, %v594, 0
        %v609 = vsel %vm598, %v595, 0
        %v612 = vsel %vm598, %v596, 0
        %v615 = vsel %vm598, %v597, 0
        %617 = vmatprep.subr.bf16.mxu0 0
        %618 = vmatpush1.bf16.xpose.msra.mxu0 0
        %619 = vmatprep.subr.bf16.mxu0 0
        %620 = vmatpush1.bf16.xpose.msra.mxu0 0
        %621 = vmatprep.subr.bf16.mxu0 0
        %622 = vmatpush1.bf16.xpose.msra.mxu0 0
        %623 = vmatprep.subr.bf16.mxu0 0
        %624 = vmatpush1.bf16.xpose.msra.mxu0 0
        %625 = vmatprep.subr.bf16.mxu0 0
        %626 = vmatpush1.bf16.xpose.msra.mxu0 %v615
        %627 = vmatprep.subr.bf16.mxu0 0
        %628 = vmatpush1.bf16.xpose.msra.mxu0 %v612
        %629 = vmatprep.subr.bf16.mxu0 0
        %630 = vmatpush1.bf16.xpose.msra.mxu0 %v609
        %631 = vmatprep.subr.bf16.mxu0 0
        %632 = vmatpush1.bf16.xpose.msra.mxu0 %v606
        %633 = vmatprep.subr.bf16.mxu0 0
        %634 = vmatpush2.bf16.xpose.msra.mxu0 0
        %635 = vmatprep.subr.bf16.mxu0 0
        %636 = vmatpush2.bf16.xpose.msra.mxu0 0
        %637 = vmatprep.subr.bf16.mxu0 0
        %638 = vmatpush2.bf16.xpose.msra.mxu0 0
        %639 = vmatprep.subr.bf16.mxu0 0
        %640 = vmatpush2.bf16.xpose.msra.mxu0 0
        %641 = vmatprep.subr.bf16.mxu0 0
        %642 = vmatpush2.bf16.xpose.msra.mxu0 0
        %643 = vmatprep.subr.bf16.mxu0 0
        %644 = vmatpush2.bf16.xpose.msra.mxu0 0
        %645 = vmatprep.subr.bf16.mxu0 0
        %646 = vmatpush2.bf16.xpose.msra.mxu0 0
        %647 = vmatprep.subr.bf16.mxu0 0
        %648 = vmatpush2.bf16.xpose.msra.mxu0 0
        %649 = vmatprep.mubr.bf16.mxu0 0
        %650 = vmatmul.mubr.bf16.gmra.mxu0 %v600
        %v651 = vpop.f32.mrf.mxu0
        %v652 = vadd.f32 0.0, %v651
        %v653 = vpop.f32.mrf.mxu0
        %v654 = vpop.f32.mrf.mxu0
        %v655 = vadd.f32 0.0, %v654
        %v656 = vpop.f32.mrf.mxu0
        %657 = vmatprep.mubr.bf16.mxu0 0
        %658 = vmatmul.mubr.bf16.gmra.mxu0 %v603
        %v659 = vpop.f32.mrf.mxu0
        %v660 = vadd.f32 0.0, %v659
        %v661 = vpop.f32.mrf.mxu0
        %v662 = vpop.f32.mrf.mxu0
        %v663 = vadd.f32 0.0, %v662
        %v664 = vpop.f32.mrf.mxu0
        %665 = vdwg.mxu0
        %v666 = vld [vmem:[#allocation3] sm:$0xff]
        %v667 = vld [vmem:[#allocation3 + $0x8] sm:$0xff]
        %v668 = vld [vmem:[#allocation3 + $0x10] sm:$0xff]
        %v669 = vld [vmem:[#allocation3 + $0x18] sm:$0xff]
        %v670 = vsel %vm598, %v652, -inf
        %671 = vmax.xlane.f32.xlu0 %v670
        %v672 = vpop.xlane.xlu0 %671
        %v673 = vsel %vm598, %v655, -inf
        %674 = vmax.xlane.f32.xlu0 %v673
        %v675 = vpop.xlane.xlu0 %674
        %v676 = vsel %vm598, %v660, -inf
        %677 = vmax.xlane.f32.xlu0 %v676
        %v678 = vpop.xlane.xlu0 %677
        %v679 = vsel %vm598, %v663, -inf
        %680 = vmax.xlane.f32.xlu0 %v679
        %v681 = vpop.xlane.xlu0 %680
        %v682 = vmax.f32 %v666, %v672
        %v683 = vmax.f32 %v667, %v675
        %v684 = vmax.f32 %v668, %v678
        %v685 = vmax.f32 %v669, %v681
        %v686 = vsub.f32 %v666, %v682
        %v687 = vsub.f32 %v667, %v683
        %v688 = vsub.f32 %v668, %v684
        %v689 = vsub.f32 %v669, %v685
        %v690 = vmul.f32 %v686, 1.442695
        %v691 = vpow.pop %v690
        %v692 = vmul.f32 %v687, 1.442695
        %v693 = vpow.pop %v692
        %v694 = vmul.f32 %v688, 1.442695
        %v695 = vpow.pop %v694
        %v696 = vmul.f32 %v689, 1.442695
        %v697 = vpow.pop %v696
        %699 = vset.pattern.permute.xlu0 0
        %700 = vperm.xlu0 %699, %v682
        %v701 = vpop.permute.xlu0 %700
        %704 = vset.pattern.permute.xlu0 0
        %705 = vperm.xlu0 %704, %v683
        %v706 = vpop.permute.xlu0 %705
        %709 = vset.pattern.permute.xlu0 0
        %710 = vperm.xlu0 %709, %v684
        %v711 = vpop.permute.xlu0 %710
        %714 = vset.pattern.permute.xlu0 0
        %715 = vperm.xlu0 %714, %v685
        %v716 = vpop.permute.xlu0 %715
        %v718 = vsub.f32 %v652, %v701
        %v719 = vsub.f32 %v655, %v706
        %v720 = vsub.f32 %v660, %v711
        %v721 = vsub.f32 %v663, %v716
        %v722 = vpack.c.bf16 %v719, %v718
        %v723 = vpack.c.bf16 %v721, %v720
        %v725 = vmul.bf16 %v722, 1069105081
        %v726 = vpow.bf16.pop %v725
        %v728 = vmul.bf16 %v723, 1069105081
        %v729 = vpow.bf16.pop %v728
        %v730 = vld [vmem:[#allocation4] sm:$0xff]
        %v731 = vld [vmem:[#allocation4 + $0x8] sm:$0xff]
        %v732 = vld [vmem:[#allocation4 + $0x10] sm:$0xff]
        %v733 = vld [vmem:[#allocation4 + $0x18] sm:$0xff]
        %v734 = vmul.f32 %v691, %v730
        %v735 = vmul.f32 %v693, %v731
        %v736 = vmul.f32 %v695, %v732
        %v737 = vmul.f32 %v697, %v733
        %v738 = vunpack.c.l.bf16 %v726
        %v739 = vunpack.c.h.bf16 %v726
        %v740 = vunpack.c.l.bf16 %v729
        %v741 = vunpack.c.h.bf16 %v729
        %v742 = vsel %vm598, %v738, 0.0
        %743 = vadd.xlane.f32.xlu0 %v742
        %v744 = vpop.xlane.xlu0 %743
        %v745 = vsel %vm598, %v739, 0.0
        %746 = vadd.xlane.f32.xlu0 %v745
        %v747 = vpop.xlane.xlu0 %746
        %v748 = vsel %vm598, %v740, 0.0
        %749 = vadd.xlane.f32.xlu0 %v748
        %v750 = vpop.xlane.xlu0 %749
        %v751 = vsel %vm598, %v741, 0.0
        %752 = vadd.xlane.f32.xlu0 %v751
        %v753 = vpop.xlane.xlu0 %752
        %v754 = vadd.f32 %v734, %v744
        %v755 = vadd.f32 %v735, %v747
        %v756 = vadd.f32 %v736, %v750
        %v757 = vadd.f32 %v737, %v753
        %v758 = vld [vmem:[#allocation5] sm:$0xff]
        %v759 = vld [vmem:[#allocation5 + $0x8] sm:$0xff]
        %v760 = vld [vmem:[#allocation5 + $0x10] sm:$0xff]
        %v761 = vld [vmem:[#allocation5 + $0x18] sm:$0xff]
        %763 = vset.pattern.permute.xlu0 0
        %764 = vperm.xlu0 %763, %v691
        %v765 = vpop.permute.xlu0 %764
        %768 = vset.pattern.permute.xlu0 0
        %769 = vperm.xlu0 %768, %v693
        %v770 = vpop.permute.xlu0 %769
        %773 = vset.pattern.permute.xlu0 0
        %774 = vperm.xlu0 %773, %v695
        %v775 = vpop.permute.xlu0 %774
        %778 = vset.pattern.permute.xlu0 0
        %779 = vperm.xlu0 %778, %v697
        %v780 = vpop.permute.xlu0 %779
        %v782 = vmul.f32 %v765, %v758
        %v783 = vmul.f32 %v770, %v759
        %v784 = vmul.f32 %v775, %v760
        %v785 = vmul.f32 %v780, %v761
        %v794 = vunpack.c.l.b16 %v556
        %v795 = vunpack.c.l.b16 %v557
        %v796 = vunpack.c.l.b16 %v558
        %v797 = vunpack.c.l.b16 %v559
        %v798 = vunpack.c.l.b16 %v560
        %v799 = vunpack.c.l.b16 %v561
        %v800 = vunpack.c.l.b16 %v562
        %v801 = vunpack.c.l.b16 %v563
        %v802 = vpack.c.b16 %v795, %v794
        %v803 = vpack.c.b16 %v797, %v796
        %v804 = vpack.c.b16 %v799, %v798
        %v805 = vpack.c.b16 %v801, %v800
        %v811 = vsel %vm598, %v726, 0
        %v814 = vsel %vm598, %v729, 0
        %816 = vmatprep.subr.bf16.mxu0 0
        %817 = vmatpush1.bf16.msra.mxu0 0
        %818 = vmatprep.subr.bf16.mxu0 0
        %819 = vmatpush1.bf16.msra.mxu0 0
        %820 = vmatprep.subr.bf16.mxu0 0
        %821 = vmatpush1.bf16.msra.mxu0 0
        %822 = vmatprep.subr.bf16.mxu0 0
        %823 = vmatpush1.bf16.msra.mxu0 0
        %824 = vmatprep.subr.bf16.mxu0 0
        %825 = vmatpush1.bf16.msra.mxu0 %v805
        %826 = vmatprep.subr.bf16.mxu0 0
        %827 = vmatpush1.bf16.msra.mxu0 %v804
        %828 = vmatprep.subr.bf16.mxu0 0
        %829 = vmatpush1.bf16.msra.mxu0 %v803
        %830 = vmatprep.subr.bf16.mxu0 0
        %831 = vmatpush1.bf16.msra.mxu0 %v802
        %832 = vmatprep.subr.bf16.mxu0 0
        %833 = vmatpush2.bf16.msra.mxu0 0
        %834 = vmatprep.subr.bf16.mxu0 0
        %835 = vmatpush2.bf16.msra.mxu0 0
        %836 = vmatprep.subr.bf16.mxu0 0
        %837 = vmatpush2.bf16.msra.mxu0 0
        %838 = vmatprep.subr.bf16.mxu0 0
        %839 = vmatpush2.bf16.msra.mxu0 0
        %840 = vmatprep.subr.bf16.mxu0 0
        %841 = vmatpush2.bf16.msra.mxu0 0
        %842 = vmatprep.subr.bf16.mxu0 0
        %843 = vmatpush2.bf16.msra.mxu0 0
        %844 = vmatprep.subr.bf16.mxu0 0
        %845 = vmatpush2.bf16.msra.mxu0 0
        %846 = vmatprep.subr.bf16.mxu0 0
        %847 = vmatpush2.bf16.msra.mxu0 0
        %848 = vmatprep.mubr.bf16.mxu0 0
        %849 = vmatmul.mubr.bf16.gmra.mxu0 %v811
        %v850 = vpop.f32.mrf.mxu0
        %v851 = vadd.f32 0.0, %v850
        %v852 = vpop.f32.mrf.mxu0
        %v853 = vpop.f32.mrf.mxu0
        %v854 = vadd.f32 0.0, %v853
        %v855 = vpop.f32.mrf.mxu0
        %856 = vmatprep.mubr.bf16.mxu0 0
        %857 = vmatmul.mubr.bf16.gmra.mxu0 %v814
        %v858 = vpop.f32.mrf.mxu0
        %v859 = vadd.f32 0.0, %v858
        %v860 = vpop.f32.mrf.mxu0
        %v861 = vpop.f32.mrf.mxu0
        %v862 = vadd.f32 0.0, %v861
        %v863 = vpop.f32.mrf.mxu0
        %864 = vdwg.mxu0
        %v865 = vadd.f32 %v782, %v851
        %v866 = vadd.f32 %v783, %v854
        %v867 = vadd.f32 %v784, %v859
        %v868 = vadd.f32 %v785, %v862
        %p869 = scmp.lt.s32.totalorder %s33, 0
        // Predicated region
        $region73: #{tpu_custom_call.1} parent=47 // pred_check
          %p870 = pneg %p869
        $region74: #{tpu_custom_call.1} parent=47 // pred_check_branch
          %872 = sbr.rel (%p870) target = $region76
        $region75: #{tpu_custom_call.1} parent=47 // pred_region
          %vm873 = vcmask 7168
          %874 = vst.msk [vmem:[#allocation3] sm:$0xff] %vm873, %v682
          %875 = vst.msk [vmem:[#allocation3 + $0x8] sm:$0xff] %vm873, %v683
          %876 = vst.msk [vmem:[#allocation3 + $0x10] sm:$0xff] %vm873, %v684
          %877 = vst.msk [vmem:[#allocation3 + $0x18] sm:$0xff] %vm873, %v685
          %878 = vst.msk [vmem:[#allocation4] sm:$0xff] %vm873, %v754
          %879 = vst.msk [vmem:[#allocation4 + $0x8] sm:$0xff] %vm873, %v755
          %880 = vst.msk [vmem:[#allocation4 + $0x10] sm:$0xff] %vm873, %v756
          %881 = vst.msk [vmem:[#allocation4 + $0x18] sm:$0xff] %vm873, %v757
          %882 = vst.msk [vmem:[#allocation5] sm:$0xff] %vm598, %v865
          %883 = vst.msk [vmem:[#allocation5 + $0x8] sm:$0xff] %vm598, %v866
          %884 = vst.msk [vmem:[#allocation5 + $0x10] sm:$0xff] %vm598, %v867
          %885 = vst.msk [vmem:[#allocation5 + $0x18] sm:$0xff] %vm598, %v868
        $region76: #{tpu_custom_call.1} parent=47 // pred_fallthru
          _
        // Predicated region
        $region77: #{tpu_custom_call.1} parent=47 // pred_check
          %p886 = pneg %p409
        $region78: #{tpu_custom_call.1} parent=47 // pred_check_branch
          %888 = sbr.rel (%p886) target = $region80
        $region79: #{tpu_custom_call.1} parent=47 // pred_region
          %v889 = vrcp.pop %v754
          %v890 = vrcp.pop %v755
          %v891 = vrcp.pop %v756
          %v892 = vrcp.pop %v757
          %894 = vset.pattern.permute.xlu0 0
          %895 = vperm.xlu0 %894, %v889
          %v896 = vpop.permute.xlu0 %895
          %899 = vset.pattern.permute.xlu0 0
          %900 = vperm.xlu0 %899, %v890
          %v901 = vpop.permute.xlu0 %900
          %904 = vset.pattern.permute.xlu0 0
          %905 = vperm.xlu0 %904, %v891
          %v906 = vpop.permute.xlu0 %905
          %909 = vset.pattern.permute.xlu0 0
          %910 = vperm.xlu0 %909, %v892
          %v911 = vpop.permute.xlu0 %910
          %v913 = vmul.f32 %v865, %v896
          %v914 = vmul.f32 %v866, %v901
          %v915 = vmul.f32 %v867, %v906
          %v916 = vmul.f32 %v868, %v911
          %v917 = vpack.c.bf16 %v914, %v913
          %v918 = vpack.c.bf16 %v916, %v915
          %v919 = vld [vmem:[#allocation14] sm:$0xf]
          %v920 = vld [vmem:[#allocation14 + $0x4] sm:$0xf]
          %v921 = vld [vmem:[#allocation14 + $0x8] sm:$0xf]
          %v922 = vld [vmem:[#allocation14 + $0xc] sm:$0xf]
          %v923 = vld [vmem:[#allocation14 + $0x10] sm:$0xf]
          %v924 = vld [vmem:[#allocation14 + $0x14] sm:$0xf]
          %v925 = vld [vmem:[#allocation14 + $0x18] sm:$0xf]
          %v926 = vld [vmem:[#allocation14 + $0x1c] sm:$0xf]
          %v927 = vld [vmem:[%s6] sm:$0x1]
          %v929 = vlaneseq
          %v930 = vshrl.u32 %v929, 7
          %v931 = vsub.s32 0, %v930
          %v932 = vrot.slane %v927, %v931
          %v942 = vunpack.c.l.b16 %v919
          %v943 = vunpack.c.l.b16 %v920
          %v944 = vunpack.c.l.b16 %v921
          %v945 = vunpack.c.l.b16 %v922
          %v946 = vunpack.c.l.b16 %v923
          %v947 = vunpack.c.l.b16 %v924
          %v948 = vunpack.c.l.b16 %v925
          %v949 = vunpack.c.l.b16 %v926
          %v950 = vpack.c.b16 %v943, %v942
          %v951 = vpack.c.b16 %v945, %v944
          %v952 = vpack.c.b16 %v947, %v946
          %v953 = vpack.c.b16 %v949, %v948
          %v959 = vsel %vm598, %v917, 0
          %v962 = vsel %vm598, %v918, 0
          %964 = vmatprep.subr.bf16.mxu0 0
          %965 = vmatpush1.bf16.msra.mxu0 0
          %966 = vmatprep.subr.bf16.mxu0 0
          %967 = vmatpush1.bf16.msra.mxu0 0
          %968 = vmatprep.subr.bf16.mxu0 0
          %969 = vmatpush1.bf16.msra.mxu0 0
          %970 = vmatprep.subr.bf16.mxu0 0
          %971 = vmatpush1.bf16.msra.mxu0 0
          %972 = vmatprep.subr.bf16.mxu0 0
          %973 = vmatpush1.bf16.msra.mxu0 %v953
          %974 = vmatprep.subr.bf16.mxu0 0
          %975 = vmatpush1.bf16.msra.mxu0 %v952
          %976 = vmatprep.subr.bf16.mxu0 0
          %977 = vmatpush1.bf16.msra.mxu0 %v951
          %978 = vmatprep.subr.bf16.mxu0 0
          %979 = vmatpush1.bf16.msra.mxu0 %v950
          %980 = vmatprep.subr.bf16.mxu0 0
          %981 = vmatpush2.bf16.msra.mxu0 0
          %982 = vmatprep.subr.bf16.mxu0 0
          %983 = vmatpush2.bf16.msra.mxu0 0
          %984 = vmatprep.subr.bf16.mxu0 0
          %985 = vmatpush2.bf16.msra.mxu0 0
          %986 = vmatprep.subr.bf16.mxu0 0
          %987 = vmatpush2.bf16.msra.mxu0 0
          %988 = vmatprep.subr.bf16.mxu0 0
          %989 = vmatpush2.bf16.msra.mxu0 0
          %990 = vmatprep.subr.bf16.mxu0 0
          %991 = vmatpush2.bf16.msra.mxu0 0
          %992 = vmatprep.subr.bf16.mxu0 0
          %993 = vmatpush2.bf16.msra.mxu0 0
          %994 = vmatprep.subr.bf16.mxu0 0
          %995 = vmatpush2.bf16.msra.mxu0 0
          %996 = vmatprep.mubr.bf16.mxu0 0
          %997 = vmatmul.mubr.bf16.gmra.mxu0 %v959
          %v998 = vpop.f32.mrf.mxu0
          %v999 = vadd.f32 %v932, %v998
          %v1000 = vpop.f32.mrf.mxu0
          %v1001 = vpop.f32.mrf.mxu0
          %v1002 = vadd.f32 %v932, %v1001
          %v1003 = vpop.f32.mrf.mxu0
          %1004 = vmatprep.mubr.bf16.mxu0 0
          %1005 = vmatmul.mubr.bf16.gmra.mxu0 %v962
          %v1006 = vpop.f32.mrf.mxu0
          %v1007 = vadd.f32 %v932, %v1006
          %v1008 = vpop.f32.mrf.mxu0
          %v1009 = vpop.f32.mrf.mxu0
          %v1010 = vadd.f32 %v932, %v1009
          %v1011 = vpop.f32.mrf.mxu0
          %1012 = vdwg.mxu0
          %v1013 = vld [vmem:[%s357] sm:$0xff]
          %v1014 = vld [vmem:[%s357 + $0x8] sm:$0xff]
          %v1015 = vld [vmem:[%s357 + $0x10] sm:$0xff]
          %v1016 = vld [vmem:[%s357 + $0x18] sm:$0xff]
          %v1017 = vadd.f32 %v1013, %v999
          %v1018 = vadd.f32 %v1014, %v1002
          %v1019 = vadd.f32 %v1015, %v1007
          %v1020 = vadd.f32 %v1016, %v1010
          %1021 = vst.msk [vmem:[%s403] sm:$0xff] %vm598, %v1017
          %1022 = vst.msk [vmem:[%s403 + $0x8] sm:$0xff] %vm598, %v1018
          %1023 = vst.msk [vmem:[%s403 + $0x10] sm:$0xff] %vm598, %v1019
          %1024 = vst.msk [vmem:[%s403 + $0x18] sm:$0xff] %vm598, %v1020
        $region80: #{tpu_custom_call.1} parent=47 // pred_fallthru
          _
        %s1025 = sand.u32 %s223, 1
        %s1026 = scalar_lea.sflag [#allocation8], %s1025
        %s1027 = sand.u32 %s223, 1
        %s1028 = smul.addr %s1027, 32
        %s1029 = scalar_lea.vmem [#allocation15], %s1028
        // Predicated region
        $region81: #{tpu_custom_call.1} parent=47 // pred_check
          %p1030 = pneg %p233
        $region82: #{tpu_custom_call.1} parent=47 // pred_check_branch
          %1032 = sbr.rel (%p1030) target = $region84
        $region83: #{tpu_custom_call.1} parent=47 // pred_region
          %s1033 = smul.u32 4, %s32
          %s1035 = ssub.s32 512, 512
          %1036 = vsyncadd %s1026, %s1035
          %s1037 = smul.addr %s31, 8
          %s1038 = sadd.s32 %s1033, %s1037
          %s1039 = smul.addr %s1038, 128
          %s1040 = scalar_lea.hbm %s7, %s1039
          %s1041 = sshll.u32 %s1029, 4
          %s1042 = int_to_ptr.vmem [resolvable:$true] %s1041
          %1047 = dma.vmem_to_hbm [thread:$0]  %s1042, 512, %s1040, %s1026, 128, 128, 8
        $region84: #{tpu_custom_call.1} parent=47 // pred_fallthru
          _
      $region48: #{tpu_custom_call.1} parent=5 // pred_fallthru
        _
      %p1048 = scmp.le.s32.totalorder 2, %s21
      // Predicated region
      $region85: #{tpu_custom_call.1} parent=5 // pred_check
        %p1049 = pneg %p1048
      $region86: #{tpu_custom_call.1} parent=5 // pred_check_branch
        %1051 = sbr.rel (%p1049) target = $region88
      $region87: #{tpu_custom_call.1} parent=5 // pred_region
        %s1052 = ssub.s32 %s21, 2
        // Predicated region
        $region89: #{tpu_custom_call.1} parent=87 // pred_check
          %p1053 = pneg %p239
        $region90: #{tpu_custom_call.1} parent=87 // pred_check_branch
          %1055 = sbr.rel (%p1053) target = $region92
        $region91: #{tpu_custom_call.1} parent=87 // pred_region
          %s1056 = sand.u32 %s224, 1
          %s1057 = scalar_lea.sflag [#allocation8], %s1056
          %s1058 = sand.u32 %s224, 1
          %s1059 = smul.addr %s1058, 32
          %s1060 = scalar_lea.vmem [#allocation15], %s1059
          %1061 = dma.done %s1057, 512
        $region92: #{tpu_custom_call.1} parent=87 // pred_fallthru
          _
      $region88: #{tpu_custom_call.1} parent=5 // pred_fallthru
        _
    $region6: #{tpu_custom_call.1} parent=1 // loop_footer
      %s25 = sadd.s32 1, %s21
    $region7: #{tpu_custom_call.1} parent=1 // loop_footer_branch
      %20 = sbr.rel target = $region3
    $region8: #{tpu_custom_call.1} parent=1 // loop_exit
      _
    %1062 = vsyncpa [#allocation7], 1
    %s1063 = scalar_lea.sflag [#allocation7], 1
    %1064 = vsyncpa %s1063, 1
    %1065 = vsyncpa [#allocation10], 1
    %1066 = vsyncpa [#allocation13], 1
    %1067 = vsyncpa [#allocation8], 1
    %s1068 = scalar_lea.sflag [#allocation8], 1
    %1069 = vsyncpa %s1068, 1

</llo_original>
